<compile_context>
chip_gen: v7x
topology: tpu7x:2x2x1
jax: 0.10.0
libtpu: 0.0.40
codegen_flags: <defaults>
</compile_context>

<pallas_src>
import functools

import jax
import jax.numpy as jnp
from jax.experimental import pallas as pl
from jax.experimental.pallas import tpu as pltpu


def _uncert_ce_kernel(pred_ref, lab_ref, out_ref,
                      m_ref, d_ref, s1_ref, s0_ref,
                      nv_ref, lmin_ref, lmax_ref,
                      *, ignore_index, num_classes, hw, tile_rows, needs_mask):
    """Grid = (N, num_spatial_tiles).

    Axis 0 walks images (parallel); axis 1 walks (tile_rows, 128) spatial
    tiles of one image, carrying online-softmax state in small VMEM scratch.
    The per-image weighted-loss partial sum is written on the last tile.
    """
    j = pl.program_id(1)
    nt = pl.num_programs(1)

    # ---- per-image running state init on the first spatial tile ----
    @pl.when(j == 0)
    def _():
        m_ref[...] = jnp.full_like(m_ref, -jnp.inf)     # running max of -loss
        d_ref[...] = jnp.zeros_like(d_ref)              # running softmax denom
        s1_ref[...] = jnp.zeros_like(s1_ref)            # running sum(loss * e)
        s0_ref[...] = jnp.zeros_like(s0_ref)            # running sum(loss)
        nv_ref[...] = jnp.zeros_like(nv_ref)            # count of non-255 labels
        lmin_ref[...] = jnp.full_like(lmin_ref, 2 ** 30)
        lmax_ref[...] = jnp.full_like(lmax_ref, -1)

    lab = lab_ref[0]                                    # (TR, 128) int32

    # ---- per-pixel cross entropy on dense (TR, 128) tiles ----
    # Small unrolled loop over classes instead of a (C, HW) iota/one-hot.
    x0 = pred_ref[0, 0].astype(jnp.float32)
    xmax = x0
    tgt = jnp.where(lab == 0, x0, 0.0)
    for c in range(1, num_classes):
        xc = pred_ref[0, c].astype(jnp.float32)
        xmax = jnp.maximum(xmax, xc)
        tgt = jnp.where(lab == c, xc, tgt)
    sumexp = jnp.zeros_like(xmax)
    for c in range(num_classes):
        xc = pred_ref[0, c].astype(jnp.float32)
        sumexp = sumexp + jnp.exp(xc - xmax)
    lse = xmax + jnp.log(sumexp)                        # (TR, 128)

    # ---- mask spatial padding (only emitted when HW was padded) ----
    if needs_mask:
        ridx = jax.lax.broadcasted_iota(jnp.int32, (tile_rows, 128), 0)
        lidx = jax.lax.broadcasted_iota(jnp.int32, (tile_rows, 128), 1)
        gidx = j * (tile_rows * 128) + ridx * 128 + lidx
        real = gidx < hw
        valid = jnp.logical_and(real, lab != ignore_index)
    else:
        real = None
        valid = lab != ignore_index

    loss = jnp.where(valid, lse - tgt, 0.0)             # (TR, 128), 0 at ignore/pad

    # ---- online softmax of metric = -loss over the whole image ----
    metric = -loss if real is None else jnp.where(real, -loss, -jnp.inf)
    m_old = m_ref[...]                                  # (1, 1)
    m_new = jnp.maximum(m_old, jnp.max(metric))
    alpha = jnp.exp(m_old - m_new)                      # exp(-inf)=0 on first tile
    e = jnp.exp(metric - m_new)                         # 0 at padded pixels
    d_ref[...] = alpha * d_ref[...] + jnp.sum(e)
    s1_ref[...] = alpha * s1_ref[...] + jnp.sum(loss * e)
    s0_ref[...] = s0_ref[...] + jnp.sum(loss)
    m_ref[...] = m_new

    # ---- degenerate-label stats (reference hardcodes 255, not ignore_index) ----
    v255 = lab != 255
    if real is not None:
        v255 = jnp.logical_and(real, v255)
    nv_ref[...] = nv_ref[...] + jnp.sum(v255.astype(jnp.int32))
    lmin_ref[...] = jnp.minimum(lmin_ref[...],
                                jnp.min(jnp.where(v255, lab, 2 ** 30)))
    lmax_ref[...] = jnp.maximum(lmax_ref[...],
                                jnp.max(jnp.where(v255, lab, -1)))

    # ---- finalize the per-image partial sum on the last spatial tile ----
    @pl.when(j == nt - 1)
    def _():
        degen = jnp.logical_or(nv_ref[...] == 0, lmin_ref[...] == lmax_ref[...])
        weighted = s1_ref[...] * (jnp.float32(hw) / d_ref[...])
        contrib = jnp.where(degen, s0_ref[...], weighted)    # (1, 1)
        out_ref[0] = jnp.broadcast_to(contrib, (1, 128))


def uncertainty_ce_loss(pred_u, pseudo_label, ignore_index=255,
                        max_tile_rows=None):
    """pred_u: (N, C, H, W) float logits (NCHW; any float dtype — kept native,
       widened to f32 inside the kernel).
       pseudo_label: (N, H, W) int labels (255 / ignore_index = ignored).
       returns: scalar float32 mean of weighted per-pixel CE loss."""
    N, C, H, W = pred_u.shape
    HW = H * W
    LANES = 128

    rows = -(-HW // LANES)                      # ceil(HW / 128)
    itemsize = jnp.dtype(pred_u.dtype).itemsize

    # Tile-row budget: keep the logits tile to a few MiB (and <=512 rows so
    # the compiler-managed per-pixel f32 intermediates stay small).  With
    # double buffering this sits well inside v7x's 64 MiB VMEM and is already
    # near the HBM roofline on v5e/v6e.
    budget_bytes = 4 * 1024 * 1024
    row_budget = min(512, max(8, (budget_bytes // (C * LANES * itemsize)) // 8 * 8))
    if max_tile_rows is not None:
        row_budget = min(row_budget, max(8, (max_tile_rows // 8) * 8))

    if rows <= row_budget:
        tile_rows = rows
        rows_pad = rows
    else:
        tile_rows = row_budget
        rows_pad = -(-rows // tile_rows) * tile_rows
    hw_pad = rows_pad * LANES
    n_tiles = rows_pad // tile_rows

    # glue: reshape (contiguous, no copy) to the lane-dense kernel layout;
    # NOTE: no .astype(float32) here — the kernel reads the native dtype.
    logits = pred_u.reshape(N, C, HW)
    labels = pseudo_label.reshape(N, HW).astype(jnp.int32)
    if hw_pad != HW:
        logits = jnp.pad(logits, ((0, 0), (0, 0), (0, hw_pad - HW)))
        labels = jnp.pad(labels, ((0, 0), (0, hw_pad - HW)), constant_values=255)
    logits = logits.reshape(N, C, rows_pad, LANES)
    labels = labels.reshape(N, rows_pad, LANES)

    kernel = functools.partial(
        _uncert_ce_kernel,
        ignore_index=ignore_index, num_classes=C, hw=HW,
        tile_rows=tile_rows, needs_mask=(hw_pad != HW))

    partials = pl.pallas_call(
        kernel,
        out_shape=jax.ShapeDtypeStruct((N, 1, LANES), jnp.float32),
        grid_spec=pltpu.PrefetchScalarGridSpec(
            num_scalar_prefetch=0,
            grid=(N, n_tiles),
            in_specs=[
                pl.BlockSpec((1, C, tile_rows, LANES),
                             lambda i, j: (i, 0, j, 0)),
                pl.BlockSpec((1, tile_rows, LANES),
                             lambda i, j: (i, j, 0)),
            ],
            out_specs=pl.BlockSpec((1, 1, LANES), lambda i, j: (i, 0, 0)),
            scratch_shapes=[
                pltpu.VMEM((1, 1), jnp.float32),   # running max of -loss
                pltpu.VMEM((1, 1), jnp.float32),   # running softmax denom
                pltpu.VMEM((1, 1), jnp.float32),   # running sum(loss * e)
                pltpu.VMEM((1, 1), jnp.float32),   # running sum(loss)
                pltpu.VMEM((1, 1), jnp.int32),     # count of non-255 labels
                pltpu.VMEM((1, 1), jnp.int32),     # min non-255 label
                pltpu.VMEM((1, 1), jnp.int32),     # max non-255 label
            ]),
        compiler_params=pltpu.CompilerParams(
            dimension_semantics=("parallel", "arbitrary")),
    )(logits, labels)

    return jnp.sum(partials[:, 0, 0]) / jnp.float32(N * HW)


def _reference(pred_u, pseudo_label, ignore_index=255):
    """Pure-JAX reference mirroring the PyTorch forward."""
    N, C, H, W = pred_u.shape
    HW = H * W
    logits = jnp.transpose(pred_u, (0, 2, 3, 1)).reshape(N, HW, C).astype(jnp.float32)
    lab = pseudo_label.reshape(N, HW)
    lse = jax.scipy.special.logsumexp(logits, axis=-1)
    tgt = jnp.take_along_axis(
        logits, jnp.clip(lab, 0, C - 1)[..., None], axis=-1)[..., 0]
    valid = lab != ignore_index
    loss = jnp.where(valid, lse - tgt, 0.0)
    weight = jax.nn.softmax(-loss, axis=1) * HW
    valid255 = lab != 255
    nvalid = valid255.sum(axis=1)
    lmin = jnp.min(jnp.where(valid255, lab, 10 ** 6), axis=1)
    lmax = jnp.max(jnp.where(valid255, lab, -1), axis=1)
    degen = (nvalid == 0) | (lmin == lmax)
    weight = jnp.where(degen[:, None], 1.0, weight)
    return jnp.mean(loss * weight)


if __name__ == "__main__":
    key = jax.random.PRNGKey(0)
    k1, k2, k3, k4, k5, k6 = jax.random.split(key, 6)

    IGNORE = 255

    # --- case 1: small f32 NCHW, one image degenerate (single non-255 label) ---
    N, C, H, W = 2, 4, 16, 16
    pred_u = jax.random.normal(k1, (N, C, H, W), dtype=jnp.float32)
    labels = jax.random.randint(k2, (N, H, W), 0, C, dtype=jnp.int32)
    ignore_mask = jax.random.uniform(k3, (N, H, W)) < 0.1
    labels = jnp.where(ignore_mask, IGNORE, labels)
    labels = labels.at[1].set(jnp.where(ignore_mask[1], IGNORE, 2))

    out = jax.block_until_ready(uncertainty_ce_loss(pred_u, labels, IGNORE))
    ref = _reference(pred_u, labels, IGNORE)
    assert jnp.allclose(out, ref, rtol=1e-5, atol=1e-5), (out, ref)

    # --- case 2: bf16 logits fed straight to the kernel (native-dtype path) ---
    N2, C2, H2, W2 = 2, 4, 64, 64
    pred_b = jax.random.normal(k4, (N2, C2, H2, W2), dtype=jnp.float32)
    lab_b = jax.random.randint(k5, (N2, H2, W2), 0, C2, dtype=jnp.int32)
    lab_b = jnp.where(jax.random.uniform(k6, (N2, H2, W2)) < 0.1, IGNORE, lab_b)
    out_bf = jax.block_until_ready(
        uncertainty_ce_loss(pred_b.astype(jnp.bfloat16), lab_b, IGNORE))
    ref_bf = _reference(pred_b.astype(jnp.bfloat16).astype(jnp.float32),
                        lab_b, IGNORE)
    assert jnp.allclose(out_bf, ref_bf, rtol=1e-4, atol=1e-4), (out_bf, ref_bf)

    # --- case 3: forced multi-tile spatial grid (online softmax across tiles) ---
    N3, C3, H3, W3 = 2, 3, 64, 64
    pred_c = jax.random.normal(k5, (N3, C3, H3, W3), dtype=jnp.float32)
    lab_c = jax.random.randint(k6, (N3, H3, W3), 0, C3, dtype=jnp.int32)
    lab_c = jnp.where(jax.random.uniform(k4, (N3, H3, W3)) < 0.2, IGNORE, lab_c)
    out_t = jax.block_until_ready(
        uncertainty_ce_loss(pred_c, lab_c, IGNORE, max_tile_rows=8))
    ref_t = _reference(pred_c, lab_c, IGNORE)
    assert jnp.allclose(out_t, ref_t, rtol=1e-5, atol=1e-5), (out_t, ref_t)

    # --- case 4: HW not a multiple of 128 (spatial-padding mask path) ---
    N4, C4, H4, W4 = 2, 3, 12, 12
    pred_d = jax.random.normal(k6, (N4, C4, H4, W4), dtype=jnp.float32)
    lab_d = jax.random.randint(k4, (N4, H4, W4), 0, C4, dtype=jnp.int32)
    out_p = jax.block_until_ready(uncertainty_ce_loss(pred_d, lab_d, IGNORE))
    ref_p = _reference(pred_d, lab_d, IGNORE)
    assert jnp.allclose(out_p, ref_p, rtol=1e-5, atol=1e-5), (out_p, ref_p)

    print("KERNEL_OK")
</pallas_src>

<mosaic_0001>
module attributes {stable_mosaic.version = 11 : i64} {
  func.func @_uncert_ce_kernel(%arg0: i32, %arg1: i32, %arg2: memref<1x4x2x128xf32, #tpu.memory_space<vmem>>, %arg3: memref<1x2x128xi32, #tpu.memory_space<vmem>>, %arg4: memref<1x1x128xf32, #tpu.memory_space<vmem>>, %arg5: memref<1x1xf32, #tpu.memory_space<vmem>>, %arg6: memref<1x1xf32, #tpu.memory_space<vmem>>, %arg7: memref<1x1xf32, #tpu.memory_space<vmem>>, %arg8: memref<1x1xf32, #tpu.memory_space<vmem>>, %arg9: memref<1x1xi32, #tpu.memory_space<vmem>>, %arg10: memref<1x1xi32, #tpu.memory_space<vmem>>, %arg11: memref<1x1xi32, #tpu.memory_space<vmem>>) attributes {dimension_semantics = [#tpu.dimension_semantics<parallel>, #tpu.dimension_semantics<arbitrary>], iteration_bounds = array<i64: 2, 1>, scalar_prefetch = 0 : i64, scratch_operands = 7 : i64, tpu.core_type = #tpu.core_type<tc>, window_params = [{transform_indices = @transform_0, window_bounds = array<i64: 1, 4, 2, 128>}, {transform_indices = @transform_1, window_bounds = array<i64: 1, 2, 128>}, {transform_indices = @transform_2, window_bounds = array<i64: 1, 1, 128>}]} {
    %c0_i32 = arith.constant 0 : i32
    %0 = arith.cmpi eq, %arg1, %c0_i32 : i32
    %1 = arith.extui %0 : i1 to i32
    %c0_i32_0 = arith.constant 0 : i32
    %2 = arith.cmpi ne, %1, %c0_i32_0 : i32
    scf.if %2 {
      %cst_74 = arith.constant 0xFF800000 : f32
      %133 = vector.broadcast %cst_74 : f32 to vector<1x1xf32>
      %c0_75 = arith.constant 0 : index
      %c0_76 = arith.constant 0 : index
      %134 = vector.load %arg5[%c0_75, %c0_76] : memref<1x1xf32, #tpu.memory_space<vmem>>, vector<1x1xf32>
      tpu.vector_store %arg5[%c0_75, %c0_76], %133 {strides = array<i32>} : memref<1x1xf32, #tpu.memory_space<vmem>>, vector<1x1xf32>,
      %cst_77 = arith.constant 0.000000e+00 : f32
      %135 = vector.broadcast %cst_77 : f32 to vector<1x1xf32>
      %c0_78 = arith.constant 0 : index
      %c0_79 = arith.constant 0 : index
      %136 = vector.load %arg6[%c0_78, %c0_79] : memref<1x1xf32, #tpu.memory_space<vmem>>, vector<1x1xf32>
      tpu.vector_store %arg6[%c0_78, %c0_79], %135 {strides = array<i32>} : memref<1x1xf32, #tpu.memory_space<vmem>>, vector<1x1xf32>,
      %cst_80 = arith.constant 0.000000e+00 : f32
      %137 = vector.broadcast %cst_80 : f32 to vector<1x1xf32>
      %c0_81 = arith.constant 0 : index
      %c0_82 = arith.constant 0 : index
      %138 = vector.load %arg7[%c0_81, %c0_82] : memref<1x1xf32, #tpu.memory_space<vmem>>, vector<1x1xf32>
      tpu.vector_store %arg7[%c0_81, %c0_82], %137 {strides = array<i32>} : memref<1x1xf32, #tpu.memory_space<vmem>>, vector<1x1xf32>,
      %cst_83 = arith.constant 0.000000e+00 : f32
      %139 = vector.broadcast %cst_83 : f32 to vector<1x1xf32>
      %c0_84 = arith.constant 0 : index
      %c0_85 = arith.constant 0 : index
      %140 = vector.load %arg8[%c0_84, %c0_85] : memref<1x1xf32, #tpu.memory_space<vmem>>, vector<1x1xf32>
      tpu.vector_store %arg8[%c0_84, %c0_85], %139 {strides = array<i32>} : memref<1x1xf32, #tpu.memory_space<vmem>>, vector<1x1xf32>,
      %c0_i32_86 = arith.constant 0 : i32
      %141 = vector.broadcast %c0_i32_86 : i32 to vector<1x1xi32>
      %c0_87 = arith.constant 0 : index
      %c0_88 = arith.constant 0 : index
      %142 = vector.load %arg9[%c0_87, %c0_88] : memref<1x1xi32, #tpu.memory_space<vmem>>, vector<1x1xi32>
      tpu.vector_store %arg9[%c0_87, %c0_88], %141 {strides = array<i32>} : memref<1x1xi32, #tpu.memory_space<vmem>>, vector<1x1xi32>,
      %c1073741824_i32_89 = arith.constant 1073741824 : i32
      %143 = vector.broadcast %c1073741824_i32_89 : i32 to vector<1x1xi32>
      %c0_90 = arith.constant 0 : index
      %c0_91 = arith.constant 0 : index
      %144 = vector.load %arg10[%c0_90, %c0_91] : memref<1x1xi32, #tpu.memory_space<vmem>>, vector<1x1xi32>
      tpu.vector_store %arg10[%c0_90, %c0_91], %143 {strides = array<i32>} : memref<1x1xi32, #tpu.memory_space<vmem>>, vector<1x1xi32>,
      %c-1_i32_92 = arith.constant -1 : i32
      %145 = vector.broadcast %c-1_i32_92 : i32 to vector<1x1xi32>
      %c0_93 = arith.constant 0 : index
      %c0_94 = arith.constant 0 : index
      %146 = vector.load %arg11[%c0_93, %c0_94] : memref<1x1xi32, #tpu.memory_space<vmem>>, vector<1x1xi32>
      tpu.vector_store %arg11[%c0_93, %c0_94], %145 {strides = array<i32>} : memref<1x1xi32, #tpu.memory_space<vmem>>, vector<1x1xi32>,
    } else {
    }
    %c0 = arith.constant 0 : index
    %c0_1 = arith.constant 0 : index
    %c0_2 = arith.constant 0 : index
    %3 = vector.load %arg3[%c0, %c0_1, %c0_2] : memref<1x2x128xi32, #tpu.memory_space<vmem>>, vector<1x2x128xi32>
    %4 = vector.shape_cast %3 : vector<1x2x128xi32> to vector<2x128xi32>
    %c0_3 = arith.constant 0 : index
    %c0_4 = arith.constant 0 : index
    %c0_5 = arith.constant 0 : index
    %c0_6 = arith.constant 0 : index
    %5 = vector.load %arg2[%c0_3, %c0_4, %c0_5, %c0_6] : memref<1x4x2x128xf32, #tpu.memory_space<vmem>>, vector<1x1x2x128xf32>
    %6 = vector.shape_cast %5 : vector<1x1x2x128xf32> to vector<2x128xf32>
    %c0_i32_7 = arith.constant 0 : i32
    %7 = vector.broadcast %c0_i32_7 : i32 to vector<2x128xi32>
    %8 = arith.cmpi eq, %4, %7 : vector<2x128xi32>
    %cst = arith.constant 0.000000e+00 : f32
    %9 = vector.broadcast %cst : f32 to vector<2x128xf32>
    %10 = arith.select %8, %6, %9 : vector<2x128xi1>, vector<2x128xf32>
    %c0_8 = arith.constant 0 : index
    %c1 = arith.constant 1 : index
    %c0_9 = arith.constant 0 : index
    %c0_10 = arith.constant 0 : index
    %11 = vector.load %arg2[%c0_8, %c1, %c0_9, %c0_10] : memref<1x4x2x128xf32, #tpu.memory_space<vmem>>, vector<1x1x2x128xf32>
    %12 = vector.shape_cast %11 : vector<1x1x2x128xf32> to vector<2x128xf32>
    %13 = arith.maximumf %6, %12 : vector<2x128xf32>
    %c1_i32 = arith.constant 1 : i32
    %14 = vector.broadcast %c1_i32 : i32 to vector<2x128xi32>
    %15 = arith.cmpi eq, %4, %14 : vector<2x128xi32>
    %16 = arith.select %15, %12, %10 : vector<2x128xi1>, vector<2x128xf32>
    %c0_11 = arith.constant 0 : index
    %c2 = arith.constant 2 : index
    %c0_12 = arith.constant 0 : index
    %c0_13 = arith.constant 0 : index
    %17 = vector.load %arg2[%c0_11, %c2, %c0_12, %c0_13] : memref<1x4x2x128xf32, #tpu.memory_space<vmem>>, vector<1x1x2x128xf32>
    %18 = vector.shape_cast %17 : vector<1x1x2x128xf32> to vector<2x128xf32>
    %19 = arith.maximumf %13, %18 : vector<2x128xf32>
    %c2_i32 = arith.constant 2 : i32
    %20 = vector.broadcast %c2_i32 : i32 to vector<2x128xi32>
    %21 = arith.cmpi eq, %4, %20 : vector<2x128xi32>
    %22 = arith.select %21, %18, %16 : vector<2x128xi1>, vector<2x128xf32>
    %c0_14 = arith.constant 0 : index
    %c3 = arith.constant 3 : index
    %c0_15 = arith.constant 0 : index
    %c0_16 = arith.constant 0 : index
    %23 = vector.load %arg2[%c0_14, %c3, %c0_15, %c0_16] : memref<1x4x2x128xf32, #tpu.memory_space<vmem>>, vector<1x1x2x128xf32>
    %24 = vector.shape_cast %23 : vector<1x1x2x128xf32> to vector<2x128xf32>
    %25 = arith.maximumf %19, %24 : vector<2x128xf32>
    %c3_i32 = arith.constant 3 : i32
    %26 = vector.broadcast %c3_i32 : i32 to vector<2x128xi32>
    %27 = arith.cmpi eq, %4, %26 : vector<2x128xi32>
    %28 = arith.select %27, %24, %22 : vector<2x128xi1>, vector<2x128xf32>
    %cst_17 = arith.constant 0.000000e+00 : f32
    %29 = vector.broadcast %cst_17 : f32 to vector<2x128xf32>
    %c0_18 = arith.constant 0 : index
    %c0_19 = arith.constant 0 : index
    %c0_20 = arith.constant 0 : index
    %c0_21 = arith.constant 0 : index
    %30 = vector.load %arg2[%c0_18, %c0_19, %c0_20, %c0_21] : memref<1x4x2x128xf32, #tpu.memory_space<vmem>>, vector<1x1x2x128xf32>
    %31 = vector.shape_cast %30 : vector<1x1x2x128xf32> to vector<2x128xf32>
    %32 = arith.subf %31, %25 : vector<2x128xf32>
    %33 = math.exp %32 : vector<2x128xf32>
    %34 = arith.addf %29, %33 : vector<2x128xf32>
    %c0_22 = arith.constant 0 : index
    %c1_23 = arith.constant 1 : index
    %c0_24 = arith.constant 0 : index
    %c0_25 = arith.constant 0 : index
    %35 = vector.load %arg2[%c0_22, %c1_23, %c0_24, %c0_25] : memref<1x4x2x128xf32, #tpu.memory_space<vmem>>, vector<1x1x2x128xf32>
    %36 = vector.shape_cast %35 : vector<1x1x2x128xf32> to vector<2x128xf32>
    %37 = arith.subf %36, %25 : vector<2x128xf32>
    %38 = math.exp %37 : vector<2x128xf32>
    %39 = arith.addf %34, %38 : vector<2x128xf32>
    %c0_26 = arith.constant 0 : index
    %c2_27 = arith.constant 2 : index
    %c0_28 = arith.constant 0 : index
    %c0_29 = arith.constant 0 : index
    %40 = vector.load %arg2[%c0_26, %c2_27, %c0_28, %c0_29] : memref<1x4x2x128xf32, #tpu.memory_space<vmem>>, vector<1x1x2x128xf32>
    %41 = vector.shape_cast %40 : vector<1x1x2x128xf32> to vector<2x128xf32>
    %42 = arith.subf %41, %25 : vector<2x128xf32>
    %43 = math.exp %42 : vector<2x128xf32>
    %44 = arith.addf %39, %43 : vector<2x128xf32>
    %c0_30 = arith.constant 0 : index
    %c3_31 = arith.constant 3 : index
    %c0_32 = arith.constant 0 : index
    %c0_33 = arith.constant 0 : index
    %45 = vector.load %arg2[%c0_30, %c3_31, %c0_32, %c0_33] : memref<1x4x2x128xf32, #tpu.memory_space<vmem>>, vector<1x1x2x128xf32>
    %46 = vector.shape_cast %45 : vector<1x1x2x128xf32> to vector<2x128xf32>
    %47 = arith.subf %46, %25 : vector<2x128xf32>
    %48 = math.exp %47 : vector<2x128xf32>
    %49 = arith.addf %44, %48 : vector<2x128xf32>
    %50 = math.log %49 : vector<2x128xf32>
    %51 = arith.addf %25, %50 : vector<2x128xf32>
    %c255_i32 = arith.constant 255 : i32
    %52 = vector.broadcast %c255_i32 : i32 to vector<2x128xi32>
    %53 = arith.cmpi ne, %4, %52 : vector<2x128xi32>
    %54 = arith.subf %51, %28 : vector<2x128xf32>
    %cst_34 = arith.constant 0.000000e+00 : f32
    %55 = vector.broadcast %cst_34 : f32 to vector<2x128xf32>
    %56 = arith.select %53, %54, %55 : vector<2x128xi1>, vector<2x128xf32>
    %cst_35 = arith.constant 0.000000e+00 : f32
    %57 = vector.broadcast %cst_35 : f32 to vector<2x128xf32>
    %58 = arith.subf %57, %56 : vector<2x128xf32>
    %c0_36 = arith.constant 0 : index
    %c0_37 = arith.constant 0 : index
    %59 = vector.load %arg5[%c0_36, %c0_37] : memref<1x1xf32, #tpu.memory_space<vmem>>, vector<1x1xf32>
    %60 = vector.shape_cast %58 : vector<2x128xf32> to vector<1x2x128xf32>
    %cst_38 = arith.constant dense<0xFF800000> : vector<1xf32>
    %61 = vector.multi_reduction <maximumf>, %60, %cst_38 [1, 2] : vector<1x2x128xf32> to vector<1xf32>
    %62 = vector.shape_cast %61 : vector<1xf32> to vector<1x1x1xf32>
    %63 = vector.extract %62[0, 0, 0] : f32 from vector<1x1x1xf32>
    %64 = vector.broadcast %63 : f32 to vector<1x1xf32>
    %65 = arith.maximumf %59, %64 : vector<1x1xf32>
    %66 = arith.subf %59, %65 : vector<1x1xf32>
    %67 = math.exp %66 : vector<1x1xf32>
    %68 = vector.broadcast %65 : vector<1x1xf32> to vector<2x128xf32>
    %69 = arith.subf %58, %68 : vector<2x128xf32>
    %70 = math.exp %69 : vector<2x128xf32>
    %c0_39 = arith.constant 0 : index
    %c0_40 = arith.constant 0 : index
    %71 = vector.load %arg6[%c0_39, %c0_40] : memref<1x1xf32, #tpu.memory_space<vmem>>, vector<1x1xf32>
    %72 = arith.mulf %67, %71 : vector<1x1xf32>
    %73 = vector.shape_cast %70 : vector<2x128xf32> to vector<1x2x128xf32>
    %cst_41 = arith.constant dense<0.000000e+00> : vector<1xf32>
    %74 = vector.multi_reduction <add>, %73, %cst_41 [1, 2] : vector<1x2x128xf32> to vector<1xf32>
    %75 = vector.shape_cast %74 : vector<1xf32> to vector<1x1x1xf32>
    %76 = vector.extract %75[0, 0, 0] : f32 from vector<1x1x1xf32>
    %77 = vector.broadcast %76 : f32 to vector<1x1xf32>
    %78 = arith.addf %72, %77 : vector<1x1xf32>
    %c0_42 = arith.constant 0 : index
    %c0_43 = arith.constant 0 : index
    %79 = vector.load %arg6[%c0_42, %c0_43] : memref<1x1xf32, #tpu.memory_space<vmem>>, vector<1x1xf32>
    tpu.vector_store %arg6[%c0_42, %c0_43], %78 {strides = array<i32>} : memref<1x1xf32, #tpu.memory_space<vmem>>, vector<1x1xf32>,
    %c0_44 = arith.constant 0 : index
    %c0_45 = arith.constant 0 : index
    %80 = vector.load %arg7[%c0_44, %c0_45] : memref<1x1xf32, #tpu.memory_space<vmem>>, vector<1x1xf32>
    %81 = arith.mulf %67, %80 : vector<1x1xf32>
    %82 = arith.mulf %56, %70 : vector<2x128xf32>
    %83 = vector.shape_cast %82 : vector<2x128xf32> to vector<1x2x128xf32>
    %cst_46 = arith.constant dense<0.000000e+00> : vector<1xf32>
    %84 = vector.multi_reduction <add>, %83, %cst_46 [1, 2] : vector<1x2x128xf32> to vector<1xf32>
    %85 = vector.shape_cast %84 : vector<1xf32> to vector<1x1x1xf32>
    %86 = vector.extract %85[0, 0, 0] : f32 from vector<1x1x1xf32>
    %87 = vector.broadcast %86 : f32 to vector<1x1xf32>
    %88 = arith.addf %81, %87 : vector<1x1xf32>
    %c0_47 = arith.constant 0 : index
    %c0_48 = arith.constant 0 : index
    %89 = vector.load %arg7[%c0_47, %c0_48] : memref<1x1xf32, #tpu.memory_space<vmem>>, vector<1x1xf32>
    tpu.vector_store %arg7[%c0_47, %c0_48], %88 {strides = array<i32>} : memref<1x1xf32, #tpu.memory_space<vmem>>, vector<1x1xf32>,
    %c0_49 = arith.constant 0 : index
    %c0_50 = arith.constant 0 : index
    %90 = vector.load %arg8[%c0_49, %c0_50] : memref<1x1xf32, #tpu.memory_space<vmem>>, vector<1x1xf32>
    %91 = vector.shape_cast %56 : vector<2x128xf32> to vector<1x2x128xf32>
    %cst_51 = arith.constant dense<0.000000e+00> : vector<1xf32>
    %92 = vector.multi_reduction <add>, %91, %cst_51 [1, 2] : vector<1x2x128xf32> to vector<1xf32>
    %93 = vector.shape_cast %92 : vector<1xf32> to vector<1x1x1xf32>
    %94 = vector.extract %93[0, 0, 0] : f32 from vector<1x1x1xf32>
    %95 = vector.broadcast %94 : f32 to vector<1x1xf32>
    %96 = arith.addf %90, %95 : vector<1x1xf32>
    %c0_52 = arith.constant 0 : index
    %c0_53 = arith.constant 0 : index
    %97 = vector.load %arg8[%c0_52, %c0_53] : memref<1x1xf32, #tpu.memory_space<vmem>>, vector<1x1xf32>
    tpu.vector_store %arg8[%c0_52, %c0_53], %96 {strides = array<i32>} : memref<1x1xf32, #tpu.memory_space<vmem>>, vector<1x1xf32>,
    %c0_54 = arith.constant 0 : index
    %c0_55 = arith.constant 0 : index
    %98 = vector.load %arg5[%c0_54, %c0_55] : memref<1x1xf32, #tpu.memory_space<vmem>>, vector<1x1xf32>
    tpu.vector_store %arg5[%c0_54, %c0_55], %65 {strides = array<i32>} : memref<1x1xf32, #tpu.memory_space<vmem>>, vector<1x1xf32>,
    %c255_i32_56 = arith.constant 255 : i32
    %99 = vector.broadcast %c255_i32_56 : i32 to vector<2x128xi32>
    %100 = arith.cmpi ne, %4, %99 : vector<2x128xi32>
    %c0_57 = arith.constant 0 : index
    %c0_58 = arith.constant 0 : index
    %101 = vector.load %arg9[%c0_57, %c0_58] : memref<1x1xi32, #tpu.memory_space<vmem>>, vector<1x1xi32>
    %102 = arith.extui %100 : vector<2x128xi1> to vector<2x128xi32>
    %103 = vector.shape_cast %102 : vector<2x128xi32> to vector<1x2x128xi32>
    %cst_59 = arith.constant dense<0> : vector<1xi32>
    %104 = vector.multi_reduction <add>, %103, %cst_59 [1, 2] : vector<1x2x128xi32> to vector<1xi32>
    %105 = vector.shape_cast %104 : vector<1xi32> to vector<1x1x1xi32>
    %106 = vector.extract %105[0, 0, 0] : i32 from vector<1x1x1xi32>
    %107 = vector.broadcast %106 : i32 to vector<1x1xi32>
    %108 = arith.addi %101, %107 : vector<1x1xi32>
    %c0_60 = arith.constant 0 : index
    %c0_61 = arith.constant 0 : index
    %109 = vector.load %arg9[%c0_60, %c0_61] : memref<1x1xi32, #tpu.memory_space<vmem>>, vector<1x1xi32>
    tpu.vector_store %arg9[%c0_60, %c0_61], %108 {strides = array<i32>} : memref<1x1xi32, #tpu.memory_space<vmem>>, vector<1x1xi32>,
    %c0_62 = arith.constant 0 : index
    %c0_63 = arith.constant 0 : index
    %110 = vector.load %arg10[%c0_62, %c0_63] : memref<1x1xi32, #tpu.memory_space<vmem>>, vector<1x1xi32>
    %c1073741824_i32 = arith.constant 1073741824 : i32
    %111 = vector.broadcast %c1073741824_i32 : i32 to vector<2x128xi32>
    %112 = arith.select %100, %4, %111 : vector<2x128xi1>, vector<2x128xi32>
    %113 = vector.shape_cast %112 : vector<2x128xi32> to vector<1x2x128xi32>
    %cst_64 = arith.constant dense<2147483647> : vector<1xi32>
    %114 = vector.multi_reduction <minsi>, %113, %cst_64 [1, 2] : vector<1x2x128xi32> to vector<1xi32>
    %115 = vector.shape_cast %114 : vector<1xi32> to vector<1x1x1xi32>
    %116 = vector.extract %115[0, 0, 0] : i32 from vector<1x1x1xi32>
    %117 = vector.broadcast %116 : i32 to vector<1x1xi32>
    %118 = arith.minsi %110, %117 : vector<1x1xi32>
    %c0_65 = arith.constant 0 : index
    %c0_66 = arith.constant 0 : index
    %119 = vector.load %arg10[%c0_65, %c0_66] : memref<1x1xi32, #tpu.memory_space<vmem>>, vector<1x1xi32>
    tpu.vector_store %arg10[%c0_65, %c0_66], %118 {strides = array<i32>} : memref<1x1xi32, #tpu.memory_space<vmem>>, vector<1x1xi32>,
    %c0_67 = arith.constant 0 : index
    %c0_68 = arith.constant 0 : index
    %120 = vector.load %arg11[%c0_67, %c0_68] : memref<1x1xi32, #tpu.memory_space<vmem>>, vector<1x1xi32>
    %c-1_i32 = arith.constant -1 : i32
    %121 = vector.broadcast %c-1_i32 : i32 to vector<2x128xi32>
    %122 = arith.select %100, %4, %121 : vector<2x128xi1>, vector<2x128xi32>
    %123 = vector.shape_cast %122 : vector<2x128xi32> to vector<1x2x128xi32>
    %cst_69 = arith.constant dense<-2147483648> : vector<1xi32>
    %124 = vector.multi_reduction <maxsi>, %123, %cst_69 [1, 2] : vector<1x2x128xi32> to vector<1xi32>
    %125 = vector.shape_cast %124 : vector<1xi32> to vector<1x1x1xi32>
    %126 = vector.extract %125[0, 0, 0] : i32 from vector<1x1x1xi32>
    %127 = vector.broadcast %126 : i32 to vector<1x1xi32>
    %128 = arith.maxsi %120, %127 : vector<1x1xi32>
    %c0_70 = arith.constant 0 : index
    %c0_71 = arith.constant 0 : index
    %129 = vector.load %arg11[%c0_70, %c0_71] : memref<1x1xi32, #tpu.memory_space<vmem>>, vector<1x1xi32>
    tpu.vector_store %arg11[%c0_70, %c0_71], %128 {strides = array<i32>} : memref<1x1xi32, #tpu.memory_space<vmem>>, vector<1x1xi32>,
    %c0_i32_72 = arith.constant 0 : i32
    %130 = arith.cmpi eq, %arg1, %c0_i32_72 : i32
    %131 = arith.extui %130 : i1 to i32
    %c0_i32_73 = arith.constant 0 : i32
    %132 = arith.cmpi ne, %131, %c0_i32_73 : i32
    scf.if %132 {
      %c0_74 = arith.constant 0 : index
      %c0_75 = arith.constant 0 : index
      %133 = vector.load %arg9[%c0_74, %c0_75] : memref<1x1xi32, #tpu.memory_space<vmem>>, vector<1x1xi32>
      %c0_i32_76 = arith.constant 0 : i32
      %134 = vector.broadcast %c0_i32_76 : i32 to vector<1x1xi32>
      %135 = arith.cmpi eq, %133, %134 : vector<1x1xi32>
      %c0_77 = arith.constant 0 : index
      %c0_78 = arith.constant 0 : index
      %136 = vector.load %arg10[%c0_77, %c0_78] : memref<1x1xi32, #tpu.memory_space<vmem>>, vector<1x1xi32>
      %c0_79 = arith.constant 0 : index
      %c0_80 = arith.constant 0 : index
      %137 = vector.load %arg11[%c0_79, %c0_80] : memref<1x1xi32, #tpu.memory_space<vmem>>, vector<1x1xi32>
      %138 = arith.cmpi eq, %136, %137 : vector<1x1xi32>
      %139 = arith.ori %135, %138 : vector<1x1xi1>
      %c0_81 = arith.constant 0 : index
      %c0_82 = arith.constant 0 : index
      %140 = vector.load %arg7[%c0_81, %c0_82] : memref<1x1xf32, #tpu.memory_space<vmem>>, vector<1x1xf32>
      %c0_83 = arith.constant 0 : index
      %c0_84 = arith.constant 0 : index
      %141 = vector.load %arg6[%c0_83, %c0_84] : memref<1x1xf32, #tpu.memory_space<vmem>>, vector<1x1xf32>
      %cst_85 = arith.constant 2.560000e+02 : f32
      %142 = vector.broadcast %cst_85 : f32 to vector<1x1xf32>
      %143 = arith.divf %142, %141 : vector<1x1xf32>
      %144 = arith.mulf %140, %143 : vector<1x1xf32>
      %c0_86 = arith.constant 0 : index
      %c0_87 = arith.constant 0 : index
      %145 = vector.load %arg8[%c0_86, %c0_87] : memref<1x1xf32, #tpu.memory_space<vmem>>, vector<1x1xf32>
      %146 = arith.select %139, %145, %144 : vector<1x1xi1>, vector<1x1xf32>
      %147 = vector.shape_cast %146 : vector<1x1xf32> to vector<1x1xf32>
      %148 = vector.broadcast %147 : vector<1x1xf32> to vector<1x128xf32>
      %c0_88 = arith.constant 0 : index
      %c0_89 = arith.constant 0 : index
      %c0_90 = arith.constant 0 : index
      %149 = vector.load %arg4[%c0_88, %c0_89, %c0_90] : memref<1x1x128xf32, #tpu.memory_space<vmem>>, vector<1x1x128xf32>
      %150 = vector.shape_cast %149 : vector<1x1x128xf32> to vector<1x128xf32>
      %151 = vector.shape_cast %148 : vector<1x128xf32> to vector<1x1x128xf32>
      tpu.vector_store %arg4[%c0_88, %c0_89, %c0_90], %151 {strides = array<i32>} : memref<1x1x128xf32, #tpu.memory_space<vmem>>, vector<1x1x128xf32>,
    } else {
    }
    return
  }
  func.func @transform_0(%arg0: i32, %arg1: i32) -> (i32, i32, i32, i32) {
    %c0_i32 = arith.constant 0 : i32
    %c0_i32_0 = arith.constant 0 : i32
    %c0_i32_1 = arith.constant 0 : i32
    return %arg0, %c0_i32, %arg1, %c0_i32_0 : i32, i32, i32, i32
  }
  func.func @transform_1(%arg0: i32, %arg1: i32) -> (i32, i32, i32) {
    %c0_i32 = arith.constant 0 : i32
    %c0_i32_0 = arith.constant 0 : i32
    return %arg0, %arg1, %c0_i32 : i32, i32, i32
  }
  func.func @transform_2(%arg0: i32, %arg1: i32) -> (i32, i32, i32) {
    %c0_i32 = arith.constant 0 : i32
    %c0_i32_0 = arith.constant 0 : i32
    %c0_i32_1 = arith.constant 0 : i32
    return %arg0, %c0_i32, %c0_i32_0 : i32, i32, i32
  }
}

</mosaic_0001>

<llo_original>
// kernel: tpu_custom_call.1
$region0: #{tpu_custom_call.1}
  #allocation0 [shape = 'u32[]', space=smem, size = 0x4, offset = 0x4, fixed_abs, tag = 'smem constant byte address 0x4 - core index']
  #allocation1 [shape = 'u32[144,128]{1,0:T(1,128)}', space=vmem, size = 0x12000, scoped, tag = 'internal scratch']
  #allocation2 [shape = 'f32[1,1]{1,0:T(1,128)}', space=vmem, size = 0x200, scoped, tag = 'scratch operand']
  #allocation3 [shape = 'f32[1,1]{1,0:T(1,128)}', space=vmem, size = 0x200, scoped, tag = 'scratch operand']
  #allocation4 [shape = 'f32[1,1]{1,0:T(1,128)}', space=vmem, size = 0x200, scoped, tag = 'scratch operand']
  #allocation5 [shape = 'f32[1,1]{1,0:T(1,128)}', space=vmem, size = 0x200, scoped, tag = 'scratch operand']
  #allocation6 [shape = 's32[1,1]{1,0:T(1,128)}', space=vmem, size = 0x200, scoped, tag = 'scratch operand']
  #allocation7 [shape = 's32[1,1]{1,0:T(1,128)}', space=vmem, size = 0x200, scoped, tag = 'scratch operand']
  #allocation8 [shape = 's32[1,1]{1,0:T(1,128)}', space=vmem, size = 0x200, scoped, tag = 'scratch operand']
  %s0 = inlined_call_operand.hbm [shape: f32[2,4,2,128], index: 0, kind: input, shape index: {}]
  %s1 = inlined_call_operand.hbm [shape: s32[2,2,128], index: 1, kind: input, shape index: {}]
  %s2 = inlined_call_operand.hbm [shape: f32[2,1,128], index: 2, kind: output, shape index: {}]
  %s3 = sld [smem:[#allocation0]]
  $region57: #{tpu_custom_call.1} parent=0
    _
  %s5 = ssub.s32 1, %s3
  %s6 = scalar_select 0, %s5, %s3
  $region1: #{tpu_custom_call.1} parent=0
    #allocation9 [shape = 'u8[8192]{0}', space=vmem, size = 0x2000, scoped, tag = 'input window, operand 0']
    #allocation10 [shape = 's32[2]{0}', space=sflag, size = 0x8, scoped, tag = 'scoped memory for tpu_custom_call.1']
    #allocation11 [shape = 's32[2]{0}', space=sflag, size = 0x8, scoped, tag = 'scoped memory for tpu_custom_call.1']
    #allocation12 [shape = 'u8[2048]{0}', space=vmem, size = 0x800, scoped, tag = 'input window, operand 1']
    #allocation13 [shape = 's32[2]{0}', space=sflag, size = 0x8, scoped, tag = 'scoped memory for tpu_custom_call.1']
    #allocation14 [shape = 'u8[1024]{0}', space=vmem, size = 0x400, scoped, tag = 'output window, operand 0']
    %7 = vsyncpa [#allocation10], 0
    %s8 = scalar_lea.sflag [#allocation10], 1
    %9 = vsyncpa %s8, 0
    %10 = vsyncpa [#allocation13], 0
    %s11 = scalar_lea.sflag [#allocation13], 1
    %12 = vsyncpa %s11, 0
    %13 = vsyncpa [#allocation11], 0
    %s14 = scalar_lea.sflag [#allocation11], 1
    %15 = vsyncpa %s14, 0
    loop: start=0, step=1, limit=4
    $region2: #{tpu_custom_call.1} parent=1 // loop_pre_header
      _
    $region3: #{tpu_custom_call.1} parent=1 // loop_header
      %s17 = sphi 0, %s21
      %p18 = scmp.ge.s32.totalorder %s17, 4
      %s24 = sphi 0, %s36
      %s25 = sphi 0, %s32
      %s26 = sphi 0, %s24
      %s27 = sphi 0, %s25
      %s28 = sphi 0, %s26
      %s29 = sphi 0, %s27
      %s41 = sphi 0, %s43
      %s44 = sphi 0, %s41
      %s45 = sphi 0, %s44
      %s61 = sphi 0, %s45
      %s69 = sphi 0, %s71
      %s72 = sphi 0, %s69
      %s73 = sphi 0, %s72
      %s89 = sphi 0, %s73
      %s95 = sphi 0, %s97
      %s98 = sphi 0, %s95
      %s99 = sphi 0, %s98
      %s115 = sphi 0, %s99
    $region4: #{tpu_custom_call.1} parent=1 // loop_header_branch
      %20 = sbr.rel (%p18) target = $region8
    $region5: #{tpu_custom_call.1} parent=1 // loop_body
      %s22 = ssub.s32 %s17, 1
      %s23 = ssub.s32 %s17, 2
      %s30 = sadd.s32 1, %s25
      %p31 = scmp.ge.s32.totalorder %s30, 1
      %s32 = scalar_select %p31, 0, %s30
      %s33 = sadd.s32 1, %s24
      %s34 = scalar_select %p31, %s33, %s24
      %p35 = scmp.ge.s32.totalorder %s34, 2
      %s36 = scalar_select %p35, 0, %s34
      %s37 = ssub.s32 %s24, %s36
      %s38 = ssub.s32 %s25, %s32
      %s39 = sor.u32 %s37, %s38
      %p40 = scmp.eq.s32.totalorder %s39, 0
      %s42 = sadd.s32 %s41, 1
      %s43 = scalar_select %p40, %s41, %s42
      %p46 = pneg %p40
      %p47 = scmp.eq.s32.totalorder %s17, 1
      %p48 = por %p46, %p47
      %p49 = scmp.ne.s32.totalorder %s41, %s44
      %p50 = scmp.eq.s32.totalorder %s17, 0
      %p51 = por %p49, %p50
      %p52 = scmp.ne.s32.totalorder %s41, %s44
      %p53 = scmp.eq.s32.totalorder %s22, 1
      %p54 = por %p52, %p53
      %p55 = scmp.ne.s32.totalorder %s44, %s45
      %p56 = scmp.eq.s32.totalorder %s22, 0
      %p57 = por %p55, %p56
      %p58 = scmp.ne.s32.totalorder %s44, %s45
      %p59 = scmp.eq.s32.totalorder %s23, 1
      %p60 = por %p58, %p59
      %p62 = scmp.ne.s32.totalorder %s45, %s61
      %p63 = scmp.eq.s32.totalorder %s23, 0
      %p64 = por %p62, %p63
      %s65 = ssub.s32 %s24, %s36
      %s66 = ssub.s32 %s25, %s32
      %s67 = sor.u32 %s65, %s66
      %p68 = scmp.eq.s32.totalorder %s67, 0
      %s70 = sadd.s32 %s69, 1
      %s71 = scalar_select %p68, %s69, %s70
      %p74 = pneg %p68
      %p75 = scmp.eq.s32.totalorder %s17, 1
      %p76 = por %p74, %p75
      %p77 = scmp.ne.s32.totalorder %s69, %s72
      %p78 = scmp.eq.s32.totalorder %s17, 0
      %p79 = por %p77, %p78
      %p80 = scmp.ne.s32.totalorder %s69, %s72
      %p81 = scmp.eq.s32.totalorder %s22, 1
      %p82 = por %p80, %p81
      %p83 = scmp.ne.s32.totalorder %s72, %s73
      %p84 = scmp.eq.s32.totalorder %s22, 0
      %p85 = por %p83, %p84
      %p86 = scmp.ne.s32.totalorder %s72, %s73
      %p87 = scmp.eq.s32.totalorder %s23, 1
      %p88 = por %p86, %p87
      %p90 = scmp.ne.s32.totalorder %s73, %s89
      %p91 = scmp.eq.s32.totalorder %s23, 0
      %p92 = por %p90, %p91
      %s93 = ssub.s32 %s24, %s36
      %p94 = scmp.eq.s32.totalorder %s93, 0
      %s96 = sadd.s32 %s95, 1
      %s97 = scalar_select %p94, %s95, %s96
      %p100 = pneg %p94
      %p101 = scmp.eq.s32.totalorder %s17, 1
      %p102 = por %p100, %p101
      %p103 = scmp.ne.s32.totalorder %s95, %s98
      %p104 = scmp.eq.s32.totalorder %s17, 0
      %p105 = por %p103, %p104
      %p106 = scmp.ne.s32.totalorder %s95, %s98
      %p107 = scmp.eq.s32.totalorder %s22, 1
      %p108 = por %p106, %p107
      %p109 = scmp.ne.s32.totalorder %s98, %s99
      %p110 = scmp.eq.s32.totalorder %s22, 0
      %p111 = por %p109, %p110
      %p112 = scmp.ne.s32.totalorder %s98, %s99
      %p113 = scmp.eq.s32.totalorder %s23, 1
      %p114 = por %p112, %p113
      %p116 = scmp.ne.s32.totalorder %s99, %s115
      %p117 = scmp.eq.s32.totalorder %s23, 0
      %p118 = por %p116, %p117
      %p119 = scmp.le.s32.totalorder 1, %s17
      %p120 = scmp.lt.s32.totalorder %s17, 3
      %p121 = pnand %p119, %p120
      %p122 = pneg %p121
      // Predicated region
      $region9: #{tpu_custom_call.1} parent=5 // pred_check
        _
      $region10: #{tpu_custom_call.1} parent=5 // pred_check_branch
        %124 = sbr.rel (%p121) target = $region12
      $region11: #{tpu_custom_call.1} parent=5 // pred_region
        %s125 = ssub.s32 %s17, 1
      $region12: #{tpu_custom_call.1} parent=5 // pred_fallthru
        _
      %p126 = scmp.lt.s32.totalorder %s17, 2
      // Predicated region
      $region13: #{tpu_custom_call.1} parent=5 // pred_check
        %p127 = pneg %p126
      $region14: #{tpu_custom_call.1} parent=5 // pred_check_branch
        %129 = sbr.rel (%p127) target = $region16
      $region15: #{tpu_custom_call.1} parent=5 // pred_region
        // Predicated region
        $region17: #{tpu_custom_call.1} parent=15 // pred_check
          %p130 = pneg %p51
        $region18: #{tpu_custom_call.1} parent=15 // pred_check_branch
          %132 = sbr.rel (%p130) target = $region20
        $region19: #{tpu_custom_call.1} parent=15 // pred_region
          %s133 = sand.u32 %s41, 1
          %s134 = scalar_lea.sflag [#allocation10], %s133
          %s135 = sand.u32 %s41, 1
          %s136 = smul.addr %s135, 8
          %s137 = scalar_lea.vmem [#allocation9], %s136
          %s139 = ssub.s32 128, 128
          %140 = vsyncadd %s134, %s139
          %s141 = smul.addr %s24, 4
          %s142 = sadd.s32 %s25, %s141
          %s143 = smul.addr %s142, 32
          %s144 = scalar_lea.hbm %s0, %s143
          %s145 = sshll.u32 %s137, 4
          %s146 = int_to_ptr.vmem [resolvable:$true] %s145
          %151 = dma.hbm_to_vmem [thread:$0]  %s144, 128, %s146, %s134, 32, 32, 2
        $region20: #{tpu_custom_call.1} parent=15 // pred_fallthru
          _
        // Predicated region
        $region21: #{tpu_custom_call.1} parent=15 // pred_check
          %p152 = pneg %p79
        $region22: #{tpu_custom_call.1} parent=15 // pred_check_branch
          %154 = sbr.rel (%p152) target = $region24
        $region23: #{tpu_custom_call.1} parent=15 // pred_region
          %s155 = sand.u32 %s69, 1
          %s156 = scalar_lea.sflag [#allocation13], %s155
          %s157 = sand.u32 %s69, 1
          %s158 = smul.addr %s157, 2
          %s159 = scalar_lea.vmem [#allocation12], %s158
          %s161 = ssub.s32 32, 32
          %162 = vsyncadd %s156, %s161
          %s163 = sadd.s32 %s25, %s24
          %s164 = smul.addr %s163, 32
          %s165 = scalar_lea.hbm %s1, %s164
          %s167 = sshll.u32 %s159, 4
          %s168 = int_to_ptr.vmem [resolvable:$true] %s167
          %170 = dma.hbm_to_vmem [thread:$0]  %s165, 32, %s168, %s156
        $region24: #{tpu_custom_call.1} parent=15 // pred_fallthru
          _
      $region16: #{tpu_custom_call.1} parent=5 // pred_fallthru
        _
      %p171 = scmp.le.s32.totalorder 1, %s17
      %p172 = scmp.lt.s32.totalorder %s17, 3
      %p173 = pnand %p171, %p172
      %p174 = pneg %p173
      // Predicated region
      $region25: #{tpu_custom_call.1} parent=5 // pred_check
        _
      $region26: #{tpu_custom_call.1} parent=5 // pred_check_branch
        %176 = sbr.rel (%p173) target = $region28
      $region27: #{tpu_custom_call.1} parent=5 // pred_region
        %s177 = ssub.s32 %s17, 1
        %s178 = sand.u32 %s44, 1
        %s179 = scalar_lea.sflag [#allocation10], %s178
        %s180 = sand.u32 %s44, 1
        %s181 = smul.addr %s180, 8
        %s182 = scalar_lea.vmem [#allocation9], %s181
        // Predicated region
        $region29: #{tpu_custom_call.1} parent=27 // pred_check
          %p183 = pneg %p57
        $region30: #{tpu_custom_call.1} parent=27 // pred_check_branch
          %185 = sbr.rel (%p183) target = $region32
        $region31: #{tpu_custom_call.1} parent=27 // pred_region
          %186 = dma.done %s179, 128
        $region32: #{tpu_custom_call.1} parent=27 // pred_fallthru
          _
        %s187 = sand.u32 %s72, 1
        %s188 = scalar_lea.sflag [#allocation13], %s187
        %s189 = sand.u32 %s72, 1
        %s190 = smul.addr %s189, 2
        %s191 = scalar_lea.vmem [#allocation12], %s190
        // Predicated region
        $region33: #{tpu_custom_call.1} parent=27 // pred_check
          %p192 = pneg %p85
        $region34: #{tpu_custom_call.1} parent=27 // pred_check_branch
          %194 = sbr.rel (%p192) target = $region36
        $region35: #{tpu_custom_call.1} parent=27 // pred_region
          %195 = dma.done %s188, 32
        $region36: #{tpu_custom_call.1} parent=27 // pred_fallthru
          _
        %s196 = sand.u32 %s44, 1
        %s197 = scalar_lea.sflag [#allocation10], %s196
        %s198 = sand.u32 %s44, 1
        %s199 = smul.addr %s198, 8
        %s200 = scalar_lea.vmem [#allocation9], %s199
        %p201 = pneg %p57
        %p202 = pneg %p54
        %s203 = sand.u32 %s72, 1
        %s204 = scalar_lea.sflag [#allocation13], %s203
        %s205 = sand.u32 %s72, 1
        %s206 = smul.addr %s205, 2
        %s207 = scalar_lea.vmem [#allocation12], %s206
        %p208 = pneg %p85
        %p209 = pneg %p82
        %p210 = pneg %p111
        %p211 = pneg %p108
        %s212 = sand.u32 %s98, 1
        %s213 = scalar_lea.sflag [#allocation11], %s212
        %s214 = sand.u32 %s98, 1
        %s215 = scalar_lea.vmem [#allocation14], %s214
        %p216 = scmp.eq.s32.totalorder %s27, 0
        // Predicated region
        $region37: #{tpu_custom_call.1} parent=27 // pred_check
          %p217 = pneg %p216
        $region38: #{tpu_custom_call.1} parent=27 // pred_check_branch
          %219 = sbr.rel (%p217) target = $region40
        $region39: #{tpu_custom_call.1} parent=27 // pred_region
          %vm220 = vcmask 0
          %221 = vst.msk [vmem:[#allocation2] sm:$0x1] %vm220, -inf
          %222 = vst.msk [vmem:[#allocation3] sm:$0x1] %vm220, 0.0
          %223 = vst.msk [vmem:[#allocation4] sm:$0x1] %vm220, 0.0
          %224 = vst.msk [vmem:[#allocation5] sm:$0x1] %vm220, 0.0
          %225 = vst.msk [vmem:[#allocation6] sm:$0x1] %vm220, 0
          %226 = vst.msk [vmem:[#allocation7] sm:$0x1] %vm220, 1073741824
          %227 = vst.msk [vmem:[#allocation8] sm:$0x1] %vm220, 4294967295
        $region40: #{tpu_custom_call.1} parent=27 // pred_fallthru
          _
        %v228 = vld [vmem:[%s191] sm:$0x3]
        %v229 = vld [vmem:[%s182] sm:$0x3]
        %vm230 = vcmp.eq.s32.totalorder %v228, 0
        %v231 = vsel %vm230, %v229, 0.0
        %s232 = scalar_lea.vmem %s182, 2 [#allocation9]
        %v233 = vld [vmem:[%s232] sm:$0x3]
        %v234 = vmax.f32 %v229, %v233
        %vm235 = vcmp.eq.s32.totalorder %v228, 1
        %v236 = vsel %vm235, %v233, %v231
        %s237 = scalar_lea.vmem %s182, 4 [#allocation9]
        %v238 = vld [vmem:[%s237] sm:$0x3]
        %v239 = vmax.f32 %v234, %v238
        %vm240 = vcmp.eq.s32.totalorder %v228, 2
        %v241 = vsel %vm240, %v238, %v236
        %s242 = scalar_lea.vmem %s182, 6 [#allocation9]
        %v243 = vld [vmem:[%s242] sm:$0x3]
        %v244 = vmax.f32 %v239, %v243
        %vm245 = vcmp.eq.s32.totalorder %v228, 3
        %v246 = vsel %vm245, %v243, %v241
        %v247 = vsub.f32 %v229, %v244
        %v248 = vmul.f32 %v247, 1.442695
        %v249 = vpow.pop %v248
        %v250 = vadd.f32 %v249, 0.0
        %v251 = vsub.f32 %v233, %v244
        %v252 = vmul.f32 %v251, 1.442695
        %v253 = vpow.pop %v252
        %v254 = vadd.f32 %v250, %v253
        %v255 = vsub.f32 %v238, %v244
        %v256 = vmul.f32 %v255, 1.442695
        %v257 = vpow.pop %v256
        %v258 = vadd.f32 %v254, %v257
        %v259 = vsub.f32 %v243, %v244
        %v260 = vmul.f32 %v259, 1.442695
        %v261 = vpow.pop %v260
        %v262 = vadd.f32 %v258, %v261
        %v263 = vlog2.pop %v262
        %v264 = vmul.f32 %v263, 0.6931472
        %v265 = vadd.f32 %v244, %v264
        %vm266 = vcmp.ne.s32.totalorder %v228, 255
        %v267 = vsub.f32 %v265, %v246
        %v268 = vsel %vm266, %v267, 0.0
        %v269 = vsub.f32 0.0, %v268
        %v270 = vld [vmem:[#allocation2] sm:$0x1]
        %vm271 = vcmask 1041408
        %v272 = vsel %vm271, %v269, -inf
        %273 = vmax.xlane.f32.xlu0 %v272
        %v274 = vpop.xlane.xlu0 %273
        %v275 = vrot.slane %v274, 4
        %v276 = vmax.f32 %v274, %v275
        %v277 = vrot.slane %v276, 2
        %v278 = vmax.f32 %v276, %v277
        %v279 = vrot.slane %v278, 1
        %v280 = vmax.f32 %v278, %v279
        %s281 = vtos %v280
        %v282 = vstv %s281
        %v283 = vmax.f32 %v270, %v282
        %v284 = vsub.f32 %v270, %v283
        %v285 = vmul.f32 %v284, 1.442695
        %v286 = vpow.pop %v285
        %v288 = vlaneseq
        %v289 = vshrl.u32 %v288, 7
        %v290 = vsub.s32 0, %v289
        %v291 = vrot.slane %v283, %v290
        %292 = vset.pattern.permute.xlu0 0
        %293 = vperm.xlu0 %292, %v291
        %v294 = vpop.permute.xlu0 %293
        %v296 = vsub.f32 %v269, %v294
        %v297 = vmul.f32 %v296, 1.442695
        %v298 = vpow.pop %v297
        %v299 = vld [vmem:[#allocation3] sm:$0x1]
        %v300 = vmul.f32 %v286, %v299
        %v301 = vsel %vm271, %v298, 0.0
        %302 = vadd.xlane.f32.xlu0 %v301
        %v303 = vpop.xlane.xlu0 %302
        %v304 = vrot.slane %v303, 4
        %v305 = vadd.f32 %v303, %v304
        %v306 = vrot.slane %v305, 2
        %v307 = vadd.f32 %v305, %v306
        %v308 = vrot.slane %v307, 1
        %v309 = vadd.f32 %v307, %v308
        %s310 = vtos %v309
        %v311 = vstv %s310
        %v312 = vadd.f32 %v300, %v311
        %vm313 = vcmask 0
        %314 = vst.msk [vmem:[#allocation3] sm:$0x1] %vm313, %v312
        %v315 = vld [vmem:[#allocation4] sm:$0x1]
        %v316 = vmul.f32 %v286, %v315
        %v317 = vmul.f32 %v268, %v298
        %v318 = vsel %vm271, %v317, 0.0
        %319 = vadd.xlane.f32.xlu0 %v318
        %v320 = vpop.xlane.xlu0 %319
        %v321 = vrot.slane %v320, 4
        %v322 = vadd.f32 %v320, %v321
        %v323 = vrot.slane %v322, 2
        %v324 = vadd.f32 %v322, %v323
        %v325 = vrot.slane %v324, 1
        %v326 = vadd.f32 %v324, %v325
        %s327 = vtos %v326
        %v328 = vstv %s327
        %v329 = vadd.f32 %v316, %v328
        %330 = vst.msk [vmem:[#allocation4] sm:$0x1] %vm313, %v329
        %v331 = vld [vmem:[#allocation5] sm:$0x1]
        %v332 = vsel %vm271, %v268, 0.0
        %333 = vadd.xlane.f32.xlu0 %v332
        %v334 = vpop.xlane.xlu0 %333
        %v335 = vrot.slane %v334, 4
        %v336 = vadd.f32 %v334, %v335
        %v337 = vrot.slane %v336, 2
        %v338 = vadd.f32 %v336, %v337
        %v339 = vrot.slane %v338, 1
        %v340 = vadd.f32 %v338, %v339
        %s341 = vtos %v340
        %v342 = vstv %s341
        %v343 = vadd.f32 %v331, %v342
        %344 = vst.msk [vmem:[#allocation5] sm:$0x1] %vm313, %v343
        %345 = vst.msk [vmem:[#allocation2] sm:$0x1] %vm313, %v283
        %v346 = vld [vmem:[#allocation6] sm:$0x1]
        %v347 = vsel %vm266, 1, 0
        %v348 = vsel %vm271, %v347, 0
        %v349 = vand.u32 %v348, 65535
        %v350 = vshrl.u32 %v348, 16
        %v351 = vcvt.s32.f32 %v349
        %v352 = vcvt.s32.f32 %v350
        %353 = vadd.xlane.f32.xlu0 %v351
        %v354 = vpop.xlane.xlu0 %353
        %355 = vadd.xlane.f32.xlu0 %v352
        %v356 = vpop.xlane.xlu0 %355
        %v357 = vcvt.f32.s32 %v354
        %v358 = vcvt.f32.s32 %v356
        %v359 = vshll.u32 %v358, 16
        %v360 = vadd.s32 %v359, %v357
        %v361 = vrot.slane %v360, 4
        %v362 = vadd.s32 %v360, %v361
        %v363 = vrot.slane %v362, 2
        %v364 = vadd.s32 %v362, %v363
        %v365 = vrot.slane %v364, 1
        %v366 = vadd.s32 %v364, %v365
        %s367 = vtos %v366
        %v368 = vstv %s367
        %v369 = vadd.s32 %v346, %v368
        %370 = vst.msk [vmem:[#allocation6] sm:$0x1] %vm313, %v369
        %v371 = vld [vmem:[#allocation7] sm:$0x1]
        %v372 = vsel %vm266, %v228, 1073741824
        %v373 = vsel %vm271, %v372, 2147483647
        %v374 = vand.u32 %v373, 65535
        %v375 = vshra.s32 %v373, 16
        %v376 = vcvt.s32.f32 %v374
        %v377 = vcvt.s32.f32 %v375
        %378 = vmin.xlane.f32.xlu0 %v377
        %v379 = vpop.xlane.xlu0 %378
        %vm380 = vcmp.eq.f32.partialorder %v377, %v379
        %v381 = vsel %vm380, %v376, inf
        %382 = vmin.xlane.f32.xlu0 %v381
        %v383 = vpop.xlane.xlu0 %382
        %v384 = vcvt.f32.s32 %v383
        %v385 = vcvt.f32.s32 %v379
        %v386 = vshll.u32 %v385, 16
        %v387 = vadd.s32 %v386, %v384
        %v388 = vrot.slane %v387, 4
        %vm389 = vcmp.lt.s32.totalorder %v387, %v388
        %v390 = vsel %vm389, %v387, %v388
        %v391 = vrot.slane %v390, 2
        %vm392 = vcmp.lt.s32.totalorder %v390, %v391
        %v393 = vsel %vm392, %v390, %v391
        %v394 = vrot.slane %v393, 1
        %vm395 = vcmp.lt.s32.totalorder %v393, %v394
        %v396 = vsel %vm395, %v393, %v394
        %s397 = vtos %v396
        %v398 = vstv %s397
        %vm399 = vcmp.lt.s32.totalorder %v371, %v398
        %v400 = vsel %vm399, %v371, %v398
        %401 = vst.msk [vmem:[#allocation7] sm:$0x1] %vm313, %v400
        %v402 = vld [vmem:[#allocation8] sm:$0x1]
        %v403 = vsel %vm266, %v228, 4294967295
        %v404 = vsel %vm271, %v403, 2147483648
        %v405 = vand.u32 %v404, 65535
        %v406 = vshra.s32 %v404, 16
        %v407 = vcvt.s32.f32 %v405
        %v408 = vcvt.s32.f32 %v406
        %409 = vmax.xlane.f32.xlu0 %v408
        %v410 = vpop.xlane.xlu0 %409
        %vm411 = vcmp.eq.f32.partialorder %v408, %v410
        %v412 = vsel %vm411, %v407, -inf
        %413 = vmax.xlane.f32.xlu0 %v412
        %v414 = vpop.xlane.xlu0 %413
        %v415 = vcvt.f32.s32 %v414
        %v416 = vcvt.f32.s32 %v410
        %v417 = vshll.u32 %v416, 16
        %v418 = vadd.s32 %v417, %v415
        %v419 = vrot.slane %v418, 4
        %vm420 = vcmp.gt.s32.totalorder %v418, %v419
        %v421 = vsel %vm420, %v418, %v419
        %v422 = vrot.slane %v421, 2
        %vm423 = vcmp.gt.s32.totalorder %v421, %v422
        %v424 = vsel %vm423, %v421, %v422
        %v425 = vrot.slane %v424, 1
        %vm426 = vcmp.gt.s32.totalorder %v424, %v425
        %v427 = vsel %vm426, %v424, %v425
        %s428 = vtos %v427
        %v429 = vstv %s428
        %vm430 = vcmp.gt.s32.totalorder %v402, %v429
        %v431 = vsel %vm430, %v402, %v429
        %432 = vst.msk [vmem:[#allocation8] sm:$0x1] %vm313, %v431
        // Predicated region
        $region41: #{tpu_custom_call.1} parent=27 // pred_check
          %p433 = pneg %p216
        $region42: #{tpu_custom_call.1} parent=27 // pred_check_branch
          %435 = sbr.rel (%p433) target = $region44
        $region43: #{tpu_custom_call.1} parent=27 // pred_region
          %v436 = vld [vmem:[#allocation6] sm:$0x1]
          %vm437 = vcmp.eq.s32.totalorder %v436, 0
          %v438 = vld [vmem:[#allocation7] sm:$0x1]
          %v439 = vld [vmem:[#allocation8] sm:$0x1]
          %vm440 = vcmp.eq.s32.totalorder %v438, %v439
          %vm441 = vmor %vm437, %vm440
          %v442 = vld [vmem:[#allocation4] sm:$0x1]
          %v443 = vld [vmem:[#allocation3] sm:$0x1]
          %v444 = vrcp.pop %v443
          %v445 = vmul.f32 256.0, %v444
          %v446 = vmul.f32 %v442, %v445
          %v447 = vld [vmem:[#allocation5] sm:$0x1]
          %v448 = vsel %vm441, %v447, %v446
          %450 = vset.pattern.permute.xlu0 0
          %451 = vperm.xlu0 %450, %v448
          %v452 = vpop.permute.xlu0 %451
          %v454 = vlaneseq
          %v455 = vshrl.u32 %v454, 7
          %v456 = vsub.s32 0, %v455
          %v457 = vrot.slane %v452, %v456
          %458 = vst [vmem:[%s215] sm:$0x1] %v457
        $region44: #{tpu_custom_call.1} parent=27 // pred_fallthru
          _
        %s459 = sand.u32 %s98, 1
        %s460 = scalar_lea.sflag [#allocation11], %s459
        %s461 = sand.u32 %s98, 1
        %s462 = scalar_lea.vmem [#allocation14], %s461
        // Predicated region
        $region45: #{tpu_custom_call.1} parent=27 // pred_check
          %p463 = pneg %p108
        $region46: #{tpu_custom_call.1} parent=27 // pred_check_branch
          %465 = sbr.rel (%p463) target = $region48
        $region47: #{tpu_custom_call.1} parent=27 // pred_region
          %s467 = ssub.s32 16, 16
          %468 = vsyncadd %s460, %s467
          %s469 = smul.addr %s26, 16
          %s470 = scalar_lea.hbm %s2, %s469
          %s472 = sshll.u32 %s462, 4
          %s473 = int_to_ptr.vmem [resolvable:$true] %s472
          %475 = dma.vmem_to_hbm [thread:$0]  %s473, 16, %s470, %s460
        $region48: #{tpu_custom_call.1} parent=27 // pred_fallthru
          _
      $region28: #{tpu_custom_call.1} parent=5 // pred_fallthru
        _
      %p476 = scmp.le.s32.totalorder 2, %s17
      // Predicated region
      $region49: #{tpu_custom_call.1} parent=5 // pred_check
        %p477 = pneg %p476
      $region50: #{tpu_custom_call.1} parent=5 // pred_check_branch
        %479 = sbr.rel (%p477) target = $region52
      $region51: #{tpu_custom_call.1} parent=5 // pred_region
        %s480 = ssub.s32 %s17, 2
        // Predicated region
        $region53: #{tpu_custom_call.1} parent=51 // pred_check
          %p481 = pneg %p114
        $region54: #{tpu_custom_call.1} parent=51 // pred_check_branch
          %483 = sbr.rel (%p481) target = $region56
        $region55: #{tpu_custom_call.1} parent=51 // pred_region
          %s484 = sand.u32 %s99, 1
          %s485 = scalar_lea.sflag [#allocation11], %s484
          %s486 = sand.u32 %s99, 1
          %s487 = scalar_lea.vmem [#allocation14], %s486
          %488 = dma.done %s485, 16
        $region56: #{tpu_custom_call.1} parent=51 // pred_fallthru
          _
      $region52: #{tpu_custom_call.1} parent=5 // pred_fallthru
        _
    $region6: #{tpu_custom_call.1} parent=1 // loop_footer
      %s21 = sadd.s32 1, %s17
    $region7: #{tpu_custom_call.1} parent=1 // loop_footer_branch
      %16 = sbr.rel target = $region3
    $region8: #{tpu_custom_call.1} parent=1 // loop_exit
      _
    %489 = vsyncpa [#allocation10], 1
    %s490 = scalar_lea.sflag [#allocation10], 1
    %491 = vsyncpa %s490, 1
    %492 = vsyncpa [#allocation13], 1
    %s493 = scalar_lea.sflag [#allocation13], 1
    %494 = vsyncpa %s493, 1
    %495 = vsyncpa [#allocation11], 1
    %s496 = scalar_lea.sflag [#allocation11], 1
    %497 = vsyncpa %s496, 1

</llo_original>
